<compile_context>
chip_gen: v5e
topology: v5e:2x2
jax: 0.10.0
libtpu: 0.0.40
codegen_flags: <defaults>
</compile_context>

<pallas_src>
import functools
import numpy as np
import jax
import jax.numpy as jnp
from jax import lax
from jax.experimental import pallas as pl
from jax.experimental.pallas import tpu as pltpu


def _round_up(x, m):
    return ((x + m - 1) // m) * m


# ----------------------------- Pallas kernel --------------------------------
def agent_selector_kernel(x_ref, w1_ref, b1_ref, w2_ref, wh_ref, out_ref, *,
                          succ_col):
    # layer 1: Linear + bias -> ReLU (Dropout = identity in eval mode).
    # b1 also lights up the constant-1 "bias lane" that carries the folded
    # layer-2 / head biases through the later matmuls.
    h = jnp.dot(x_ref[...], w1_ref[...], preferred_element_type=jnp.float32)
    h = jnp.maximum(h + b1_ref[...], 0.0)

    # layer 2: Linear -> ReLU (BN1 scale + bias pre-folded into w2 rows).
    h = jnp.maximum(jnp.dot(h, w2_ref[...], preferred_element_type=jnp.float32),
                    0.0)

    # fused heads [agent | success | metrics]: one lane-dense matmul
    # (BN2 scale + all head biases pre-folded into wh rows).
    heads = jnp.dot(h, wh_ref[...], preferred_element_type=jnp.float32)

    # sigmoid on the success column only: EUP logistic over the slab, selected
    # with a (1, O_pad) one-hot lane mask blended arithmetically (no full-tile
    # iota / compare, no masked store).
    sig = jax.nn.sigmoid(heads)
    col = lax.broadcasted_iota(jnp.int32, (1, heads.shape[1]), 1)
    succ_mask = jnp.where(col == succ_col, 1.0, 0.0)          # (1, O_pad) f32
    out_ref[...] = heads + succ_mask * (sig - heads)


# ------------------------- One-time parameter prep ----------------------------
def prepare_params(params, *, eps=1e-5):
    """Fold BatchNorm + biases and pad to lane-dense shapes ONCE.

    Returns ((w1_p, b1_p, w2_p, wh_p), num_agents, num_metrics)."""
    input_dim, h1 = params["w1"].shape
    h2 = params["w2"].shape[1]
    num_agents = params["wa"].shape[1]
    num_metrics = params["wm"].shape[1]
    n_out = num_agents + 1 + num_metrics

    # ---- fold BN1 (after ReLU1) into Linear2:  (r*s1 + t1) @ W2 + b2 ----
    scale1 = params["g1"] / jnp.sqrt(params["v1"] + eps)          # [1, h1]
    shift1 = params["be1"] - params["m1"] * scale1                # [1, h1]
    w2f = params["w2"] * scale1.T                                 # [h1, h2]
    b2f = shift1 @ params["w2"] + params["b2"]                    # [1, h2]

    # ---- fold BN2 (after ReLU2) into the fused head Linear ----
    scale2 = params["g2"] / jnp.sqrt(params["v2"] + eps)          # [1, h2]
    shift2 = params["be2"] - params["m2"] * scale2                # [1, h2]
    wh = jnp.concatenate([params["wa"], params["ws"], params["wm"]], axis=1)
    bh = jnp.concatenate([params["ba"], params["bs"], params["bm"]], axis=1)
    whf = wh * scale2.T                                           # [h2, n_out]
    bhf = shift2 @ wh + bh                                        # [1, n_out]

    # ---- pad hidden/output dims to 128 lanes; reserve one padding lane per
    #      hidden layer as the constant-1 bias lane.  Input dim stays unpadded.
    H1_pad = _round_up(h1 + 1, 128)
    H2_pad = _round_up(h2 + 1, 128)
    O_pad = _round_up(n_out, 128)
    ones1, ones2 = h1, h2          # bias-lane column indices (zero-padding lanes)

    w1_p = jnp.zeros((input_dim, H1_pad), jnp.float32).at[:, :h1].set(params["w1"])
    # b1 stays a ref; its bias-lane entry is 1.0 (w1 column there is zero, so
    # ReLU(0 + 1) = 1 survives and carries b2f through the next matmul).
    b1_p = (jnp.zeros((1, H1_pad), jnp.float32)
            .at[:, :h1].set(params["b1"])
            .at[0, ones1].set(1.0))

    w2_p = (jnp.zeros((H1_pad, H2_pad), jnp.float32)
            .at[:h1, :h2].set(w2f)
            .at[ones1, :h2].set(b2f[0])        # bias row via the ones lane
            .at[ones1, ones2].set(1.0))        # propagate the ones lane: ReLU(1)=1

    wh_p = (jnp.zeros((H2_pad, O_pad), jnp.float32)
            .at[:h2, :n_out].set(whf)
            .at[ones2, :n_out].set(bhf[0]))    # fused-head bias row

    return (w1_p, b1_p, w2_p, wh_p), num_agents, num_metrics


# ------------------------------- Forward --------------------------------------
def make_agent_selector_forward(params, *, eps=1e-5, tm_cap=256):
    """Build a jitted forward whose hot path is a single pallas_call."""
    (w1_p, b1_p, w2_p, wh_p), num_agents, num_metrics = prepare_params(
        params, eps=eps)
    succ_col = num_agents
    kernel = functools.partial(agent_selector_kernel, succ_col=succ_col)

    @jax.jit
    def _forward(x, w1_p, b1_p, w2_p, wh_p):
        B, D = x.shape
        H1_pad = w1_p.shape[1]
        H2_pad = w2_p.shape[1]
        O_pad = wh_p.shape[1]

        # Batch tile: whole (8-aligned) batch when small, 256-row tiles when
        # big so the "parallel" grid has >=2 steps for v7x's two TensorCores.
        TM = min(_round_up(B, 8), tm_cap)
        B_pad = _round_up(B, TM)
        x_p = x if B_pad == B else jnp.pad(x, ((0, B_pad - B), (0, 0)))

        const = lambda i: (0, 0)   # weights stay VMEM-resident across the grid
        slab = pl.pallas_call(
            kernel,
            out_shape=jax.ShapeDtypeStruct((B_pad, O_pad), jnp.float32),
            grid=(B_pad // TM,),
            in_specs=[
                pl.BlockSpec((TM, D), lambda i: (i, 0)),   # D unpadded (= full dim)
                pl.BlockSpec((D, H1_pad), const),
                pl.BlockSpec((1, H1_pad), const),
                pl.BlockSpec((H1_pad, H2_pad), const),
                pl.BlockSpec((H2_pad, O_pad), const),
            ],
            out_specs=pl.BlockSpec((TM, O_pad), lambda i: (i, 0)),
            compiler_params=pltpu.CompilerParams(
                dimension_semantics=("parallel",)),
        )(x_p, w1_p, b1_p, w2_p, wh_p)

        agent_logits = slab[:B, :num_agents]
        success_prob = slab[:B, succ_col:succ_col + 1]
        metrics = slab[:B, succ_col + 1:succ_col + 1 + num_metrics]
        return agent_logits, success_prob, metrics

    return lambda x: _forward(x, w1_p, b1_p, w2_p, wh_p)


# --------------------------- Parameter creation -------------------------------
def init_params(key, input_dim, hidden_dims, num_agents, num_metrics):
    """Deterministic synthetic parameters. Linear weights are stored already
    transposed to [in, out]; all per-feature vectors are stored as [1, out]."""
    assert len(hidden_dims) == 2, "kernel is unrolled for two hidden layers"
    h1, h2 = hidden_dims
    ks = jax.random.split(key, 13)

    def lin(k, fan_in, fan_out):
        kw, kb = jax.random.split(k)
        bound = 1.0 / np.sqrt(fan_in)
        w = jax.random.uniform(kw, (fan_in, fan_out), jnp.float32, -bound, bound)
        b = jax.random.uniform(kb, (1, fan_out), jnp.float32, -bound, bound)
        return w, b

    w1, b1 = lin(ks[0], input_dim, h1)
    w2, b2 = lin(ks[1], h1, h2)
    wa, ba = lin(ks[2], h2, num_agents)
    ws, bs = lin(ks[3], h2, 1)
    wm, bm = lin(ks[4], h2, num_metrics)

    def bn(kg, kb, km, kv, dim):
        g = 1.0 + 0.1 * jax.random.normal(kg, (1, dim), jnp.float32)
        be = 0.1 * jax.random.normal(kb, (1, dim), jnp.float32)
        m = 0.1 * jax.random.normal(km, (1, dim), jnp.float32)
        v = jnp.abs(1.0 + 0.1 * jax.random.normal(kv, (1, dim), jnp.float32))
        return g, be, m, v

    g1, be1, m1, v1 = bn(ks[5], ks[6], ks[7], ks[8], h1)
    g2, be2, m2, v2 = bn(ks[9], ks[10], ks[11], ks[12], h2)

    return dict(
        w1=w1, b1=b1, g1=g1, be1=be1, m1=m1, v1=v1,
        w2=w2, b2=b2, g2=g2, be2=be2, m2=m2, v2=v2,
        wa=wa, ba=ba, ws=ws, bs=bs, wm=wm, bm=bm,
    )


# ------------------------------ Reference ------------------------------------
def reference_forward(x, p, eps=1e-5):
    h = jnp.maximum(x @ p["w1"] + p["b1"], 0.0)
    h = (h - p["m1"]) * (p["g1"] / jnp.sqrt(p["v1"] + eps)) + p["be1"]
    h = jnp.maximum(h @ p["w2"] + p["b2"], 0.0)
    h = (h - p["m2"]) * (p["g2"] / jnp.sqrt(p["v2"] + eps)) + p["be2"]
    agent = h @ p["wa"] + p["ba"]
    succ = jax.nn.sigmoid(h @ p["ws"] + p["bs"])
    metrics = h @ p["wm"] + p["bm"]
    return agent, succ, metrics


# --------------------------------- Main ---------------------------------------
if __name__ == "__main__":
    B = 8
    input_dim = 32
    hidden_dims = [64, 32]
    num_agents = 4
    num_metrics = 3

    key = jax.random.PRNGKey(0)
    kx, kp = jax.random.split(key)
    x = jax.random.normal(kx, (B, input_dim), jnp.float32)
    params = init_params(kp, input_dim, hidden_dims, num_agents, num_metrics)

    # One-time prep (fold + pad) happens here; the returned callable's hot path
    # is just the pallas_call + output slices.
    forward = make_agent_selector_forward(params)

    agent_logits, success_prob, metrics = jax.block_until_ready(forward(x))

    ref_agent, ref_succ, ref_metrics = reference_forward(x, params)
    np.testing.assert_allclose(np.asarray(agent_logits), np.asarray(ref_agent),
                               rtol=1e-4, atol=1e-5)
    np.testing.assert_allclose(np.asarray(success_prob), np.asarray(ref_succ),
                               rtol=1e-4, atol=1e-5)
    np.testing.assert_allclose(np.asarray(metrics), np.asarray(ref_metrics),
                               rtol=1e-4, atol=1e-5)

    print("KERNEL_OK")
</pallas_src>

<mosaic_0001>
module attributes {stable_mosaic.version = 11 : i64} {
  func.func @agent_selector_kernel(%arg0: i32, %arg1: memref<8x32xf32, #tpu.memory_space<vmem>>, %arg2: memref<32x128xf32, #tpu.memory_space<vmem>>, %arg3: memref<1x128xf32, #tpu.memory_space<vmem>>, %arg4: memref<128x128xf32, #tpu.memory_space<vmem>>, %arg5: memref<128x128xf32, #tpu.memory_space<vmem>>, %arg6: memref<8x128xf32, #tpu.memory_space<vmem>>) attributes {dimension_semantics = [#tpu.dimension_semantics<parallel>], iteration_bounds = array<i64: 1>, scalar_prefetch = 0 : i64, scratch_operands = 0 : i64, tpu.core_type = #tpu.core_type<tc>, window_params = [{transform_indices = @transform_0, window_bounds = array<i64: 8, 32>}, {pipeline_mode = #tpu.pipeline_mode<synchronous>, transform_indices = @transform_1, window_bounds = array<i64: 32, 128>}, {pipeline_mode = #tpu.pipeline_mode<synchronous>, transform_indices = @transform_2, window_bounds = array<i64: 1, 128>}, {pipeline_mode = #tpu.pipeline_mode<synchronous>, transform_indices = @transform_3, window_bounds = array<i64: 128, 128>}, {pipeline_mode = #tpu.pipeline_mode<synchronous>, transform_indices = @transform_4, window_bounds = array<i64: 128, 128>}, {transform_indices = @transform_5, window_bounds = array<i64: 8, 128>}]} {
    %c0 = arith.constant 0 : index
    %c0_0 = arith.constant 0 : index
    %0 = vector.load %arg1[%c0, %c0_0] : memref<8x32xf32, #tpu.memory_space<vmem>>, vector<8x32xf32>
    %c0_1 = arith.constant 0 : index
    %c0_2 = arith.constant 0 : index
    %1 = vector.load %arg2[%c0_1, %c0_2] : memref<32x128xf32, #tpu.memory_space<vmem>>, vector<32x128xf32>
    %cst = arith.constant dense<0.000000e+00> : vector<8x128xf32>
    %2 = tpu.matmul %0, %1, %cst {dimension_numbers = #tpu.dot_dimension_numbers<[1], [0], [0], [1], [0, 0, 1, 1], [], []>} : vector<8x32xf32>, vector<32x128xf32>, vector<8x128xf32> -> vector<8x128xf32>
    %c0_3 = arith.constant 0 : index
    %c0_4 = arith.constant 0 : index
    %3 = vector.load %arg3[%c0_3, %c0_4] : memref<1x128xf32, #tpu.memory_space<vmem>>, vector<1x128xf32>
    %4 = vector.broadcast %3 : vector<1x128xf32> to vector<8x128xf32>
    %5 = arith.addf %2, %4 : vector<8x128xf32>
    %cst_5 = arith.constant 0.000000e+00 : f32
    %6 = vector.broadcast %cst_5 : f32 to vector<8x128xf32>
    %7 = arith.maximumf %5, %6 : vector<8x128xf32>
    %c0_6 = arith.constant 0 : index
    %c0_7 = arith.constant 0 : index
    %8 = vector.load %arg4[%c0_6, %c0_7] : memref<128x128xf32, #tpu.memory_space<vmem>>, vector<128x128xf32>
    %cst_8 = arith.constant dense<0.000000e+00> : vector<8x128xf32>
    %9 = tpu.matmul %7, %8, %cst_8 {dimension_numbers = #tpu.dot_dimension_numbers<[1], [0], [0], [1], [0, 0, 1, 1], [], []>} : vector<8x128xf32>, vector<128x128xf32>, vector<8x128xf32> -> vector<8x128xf32>
    %cst_9 = arith.constant 0.000000e+00 : f32
    %10 = vector.broadcast %cst_9 : f32 to vector<8x128xf32>
    %11 = arith.maximumf %9, %10 : vector<8x128xf32>
    %c0_10 = arith.constant 0 : index
    %c0_11 = arith.constant 0 : index
    %12 = vector.load %arg5[%c0_10, %c0_11] : memref<128x128xf32, #tpu.memory_space<vmem>>, vector<128x128xf32>
    %cst_12 = arith.constant dense<0.000000e+00> : vector<8x128xf32>
    %13 = tpu.matmul %11, %12, %cst_12 {dimension_numbers = #tpu.dot_dimension_numbers<[1], [0], [0], [1], [0, 0, 1, 1], [], []>} : vector<8x128xf32>, vector<128x128xf32>, vector<8x128xf32> -> vector<8x128xf32>
    %14 = arith.negf %13 : vector<8x128xf32>
    %15 = math.exp %14 : vector<8x128xf32>
    %cst_13 = arith.constant 1.000000e+00 : f32
    %16 = vector.broadcast %cst_13 : f32 to vector<8x128xf32>
    %17 = arith.addf %16, %15 : vector<8x128xf32>
    %18 = arith.divf %16, %17 : vector<8x128xf32>
    %19 = tpu.iota {dimensions = array<i32: 1>} : vector<1x128xi32>
    %c4_i32 = arith.constant 4 : i32
    %20 = vector.broadcast %c4_i32 : i32 to vector<1x128xi32>
    %21 = arith.cmpi eq, %19, %20 : vector<1x128xi32>
    %cst_14 = arith.constant 1.000000e+00 : f32
    %cst_15 = arith.constant 0.000000e+00 : f32
    %22 = vector.broadcast %cst_14 : f32 to vector<1x128xf32>
    %23 = vector.broadcast %cst_15 : f32 to vector<1x128xf32>
    %24 = arith.select %21, %22, %23 : vector<1x128xi1>, vector<1x128xf32>
    %25 = arith.subf %18, %13 : vector<8x128xf32>
    %26 = vector.broadcast %24 : vector<1x128xf32> to vector<8x128xf32>
    %27 = arith.mulf %26, %25 : vector<8x128xf32>
    %28 = arith.addf %13, %27 : vector<8x128xf32>
    %c0_16 = arith.constant 0 : index
    %c0_17 = arith.constant 0 : index
    %29 = vector.load %arg6[%c0_16, %c0_17] : memref<8x128xf32, #tpu.memory_space<vmem>>, vector<8x128xf32>
    tpu.vector_store %arg6[%c0_16, %c0_17], %28 {strides = array<i32>} : memref<8x128xf32, #tpu.memory_space<vmem>>, vector<8x128xf32>,
    return
  }
  func.func @transform_0(%arg0: i32) -> (i32, i32) {
    %c0_i32 = arith.constant 0 : i32
    %c0_i32_0 = arith.constant 0 : i32
    return %arg0, %c0_i32 : i32, i32
  }
  func.func @transform_1(%arg0: i32) -> (i32, i32) {
    %c0_i32 = arith.constant 0 : i32
    %c0_i32_0 = arith.constant 0 : i32
    %c0_i32_1 = arith.constant 0 : i32
    return %c0_i32, %c0_i32_0 : i32, i32
  }
  func.func @transform_2(%arg0: i32) -> (i32, i32) {
    %c0_i32 = arith.constant 0 : i32
    %c0_i32_0 = arith.constant 0 : i32
    %c0_i32_1 = arith.constant 0 : i32
    return %c0_i32, %c0_i32_0 : i32, i32
  }
  func.func @transform_3(%arg0: i32) -> (i32, i32) {
    %c0_i32 = arith.constant 0 : i32
    %c0_i32_0 = arith.constant 0 : i32
    %c0_i32_1 = arith.constant 0 : i32
    return %c0_i32, %c0_i32_0 : i32, i32
  }
  func.func @transform_4(%arg0: i32) -> (i32, i32) {
    %c0_i32 = arith.constant 0 : i32
    %c0_i32_0 = arith.constant 0 : i32
    %c0_i32_1 = arith.constant 0 : i32
    return %c0_i32, %c0_i32_0 : i32, i32
  }
  func.func @transform_5(%arg0: i32) -> (i32, i32) {
    %c0_i32 = arith.constant 0 : i32
    %c0_i32_0 = arith.constant 0 : i32
    return %arg0, %c0_i32 : i32, i32
  }
}

</mosaic_0001>

<llo_original>
// kernel: _forward.1
$region0: #{_forward.1}
  #allocation0 [shape = 'u32[]', space=smem, size = 0x4, offset = 0x4, fixed_abs, tag = 'smem constant byte address 0x4 - core index']
  #allocation1 [shape = 'u32[72,128]{1,0:T(1,128)}', space=vmem, size = 0x9000, scoped, tag = 'internal scratch']
  %s0 = inlined_call_operand.hbm [shape: f32[8,32], index: 0, kind: input, shape index: {}]
  %s1 = inlined_call_operand.hbm [shape: f32[32,128], index: 1, kind: input, shape index: {}]
  %s2 = inlined_call_operand.vmem [shape: f32[1,128], index: 2, kind: input, shape index: {}]
  %s3 = inlined_call_operand.hbm [shape: f32[128,128], index: 3, kind: input, shape index: {}]
  %s4 = inlined_call_operand.hbm [shape: f32[128,128], index: 4, kind: input, shape index: {}]
  %s5 = inlined_call_operand.vmem [shape: f32[8,128], index: 5, kind: output, shape index: {}]
  %s6 = sld [smem:[#allocation0]]
  $region46: #{_forward.1} parent=0
    _
  %s8 = ssub.s32 1, %s6
  %s9 = scalar_select 0, %s8, %s6
  $region1: #{_forward.1} parent=0
    #allocation2 [shape = 'u8[4096]{0}', space=vmem, size = 0x1000, scoped, tag = 'input window, operand 0, single buffered']
    #allocation3 [shape = 's32[1]{0}', space=sflag, size = 0x4, scoped, tag = 'scoped memory for _forward.1']
    #allocation4 [shape = 'u8[16384]{0}', space=vmem, size = 0x4000, scoped, tag = 'input window, operand 1, single buffered']
    #allocation5 [shape = 's32[1]{0}', space=sflag, size = 0x4, scoped, tag = 'scoped memory for _forward.1']
    #allocation6 [shape = 'u8[65536]{0}', space=vmem, size = 0x10000, scoped, tag = 'input window, operand 3, single buffered']
    #allocation7 [shape = 'u8[65536]{0}', space=vmem, size = 0x10000, scoped, tag = 'input window, operand 4, single buffered']
    #allocation8 [shape = 's32[1]{0}', space=sflag, size = 0x4, scoped, tag = 'scoped memory for _forward.1']
    %10 = vsyncpa [#allocation3], 0
    %11 = vsyncpa [#allocation5], 0
    %12 = vsyncpa [#allocation8], 0
    // Predicated region
    $region2: #{_forward.1} parent=1 // pred_check
      _
    $region3: #{_forward.1} parent=1 // pred_check_branch
      %14 = sbr.rel (0) target = $region5
    $region4: #{_forward.1} parent=1 // pred_region
      %16 = vsyncadd [#allocation3], 0
      %s18 = sshll.u32 %s0, 4
      %s19 = int_to_ptr.hbm [resolvable:$true] %s18
      %s20 = sshll.u32 [#allocation2], 4
      %s21 = int_to_ptr.vmem [resolvable:$true] %s20
      %23 = dma.hbm_to_vmem [thread:$0]  %s19, 128, %s21, [#allocation3]
    $region5: #{_forward.1} parent=1 // pred_fallthru
      _
    // Predicated region
    $region6: #{_forward.1} parent=1 // pred_check
      _
    $region7: #{_forward.1} parent=1 // pred_check_branch
      %25 = sbr.rel (0) target = $region9
    $region8: #{_forward.1} parent=1 // pred_region
      %27 = vsyncadd [#allocation5], 0
      %s28 = sshll.u32 %s1, 4
      %s29 = int_to_ptr.hbm [resolvable:$true] %s28
      %s30 = sshll.u32 [#allocation4], 4
      %s31 = int_to_ptr.vmem [resolvable:$true] %s30
      %36 = dma.hbm_to_vmem [thread:$0]  %s29, 512, %s31, [#allocation5], 128, 128, 8
    $region9: #{_forward.1} parent=1 // pred_fallthru
      _
    // Predicated region
    $region10: #{_forward.1} parent=1 // pred_check
      _
    $region11: #{_forward.1} parent=1 // pred_check_branch
      %38 = sbr.rel (0) target = $region13
    $region12: #{_forward.1} parent=1 // pred_region
      _
    $region13: #{_forward.1} parent=1 // pred_fallthru
      _
    // Predicated region
    $region14: #{_forward.1} parent=1 // pred_check
      _
    $region15: #{_forward.1} parent=1 // pred_check_branch
      %40 = sbr.rel (0) target = $region17
    $region16: #{_forward.1} parent=1 // pred_region
      %42 = vsyncadd [#allocation5], 0
      %s43 = sshll.u32 %s3, 4
      %s44 = int_to_ptr.hbm [resolvable:$true] %s43
      %s45 = sshll.u32 [#allocation6], 4
      %s46 = int_to_ptr.vmem [resolvable:$true] %s45
      %51 = dma.hbm_to_vmem [thread:$0]  %s44, 2048, %s46, [#allocation5], 128, 128, 8
    $region17: #{_forward.1} parent=1 // pred_fallthru
      _
    // Predicated region
    $region18: #{_forward.1} parent=1 // pred_check
      _
    $region19: #{_forward.1} parent=1 // pred_check_branch
      %53 = sbr.rel (0) target = $region21
    $region20: #{_forward.1} parent=1 // pred_region
      %55 = vsyncadd [#allocation8], 0
      %s56 = sshll.u32 %s4, 4
      %s57 = int_to_ptr.hbm [resolvable:$true] %s56
      %s58 = sshll.u32 [#allocation7], 4
      %s59 = int_to_ptr.vmem [resolvable:$true] %s58
      %64 = dma.hbm_to_vmem [thread:$0]  %s57, 2048, %s59, [#allocation8], 128, 128, 8
    $region21: #{_forward.1} parent=1 // pred_fallthru
      _
    // Predicated region
    $region22: #{_forward.1} parent=1 // pred_check
      _
    $region23: #{_forward.1} parent=1 // pred_check_branch
      %66 = sbr.rel (0) target = $region25
    $region24: #{_forward.1} parent=1 // pred_region
      %68 = dma.done [#allocation3], 128
    $region25: #{_forward.1} parent=1 // pred_fallthru
      _
    // Predicated region
    $region26: #{_forward.1} parent=1 // pred_check
      _
    $region27: #{_forward.1} parent=1 // pred_check_branch
      %70 = sbr.rel (0) target = $region29
    $region28: #{_forward.1} parent=1 // pred_region
      %72 = dma.done [#allocation5], 512
    $region29: #{_forward.1} parent=1 // pred_fallthru
      _
    // Predicated region
    $region30: #{_forward.1} parent=1 // pred_check
      _
    $region31: #{_forward.1} parent=1 // pred_check_branch
      %74 = sbr.rel (0) target = $region33
    $region32: #{_forward.1} parent=1 // pred_region
      %76 = dma.done [#allocation5], 2048
    $region33: #{_forward.1} parent=1 // pred_fallthru
      _
    // Predicated region
    $region34: #{_forward.1} parent=1 // pred_check
      _
    $region35: #{_forward.1} parent=1 // pred_check_branch
      %78 = sbr.rel (0) target = $region37
    $region36: #{_forward.1} parent=1 // pred_region
      %80 = dma.done [#allocation8], 2048
    $region37: #{_forward.1} parent=1 // pred_fallthru
      _
    %v81 = vld [vmem:[#allocation2] sm:$0xff]
    %v82 = vld [vmem:[#allocation4] sm:$0xff]
    %v83 = vld [vmem:[#allocation4 + $0x8] sm:$0xff]
    %v84 = vld [vmem:[#allocation4 + $0x10] sm:$0xff]
    %v85 = vld [vmem:[#allocation4 + $0x18] sm:$0xff]
    %v86 = vld [vmem:[%s2] sm:$0x1]
    %v88 = vperm.slane %v86, 0
    %vm90 = vcmask 261120
    %v92 = vsel %vm90, %v81, 0
    %94 = vmatpush.msra.mxu0 0.0
    %95 = vmatpush.msra.mxu0 0.0
    %96 = vmatpush.msra.mxu0 0.0
    %97 = vmatpush.msra.mxu0 0.0
    %98 = vmatpush.msra.mxu0 0.0
    %99 = vmatpush.msra.mxu0 0.0
    %100 = vmatpush.msra.mxu0 0.0
    %101 = vmatpush.msra.mxu0 0.0
    %102 = vmatpush.msra.mxu0 0.0
    %103 = vmatpush.msra.mxu0 0.0
    %104 = vmatpush.msra.mxu0 0.0
    %105 = vmatpush.msra.mxu0 0.0
    %106 = vmatpush.msra.mxu0 %v85
    %107 = vmatpush.msra.mxu0 %v84
    %108 = vmatpush.msra.mxu0 %v83
    %109 = vmatpush.msra.mxu0 %v82
    %110 = vmatmul.f32.gmra.mxu0 %v92
    %v111 = vpop.f32.mrf.mxu0
    %v112 = vadd.f32 %v88, %v111
    %113 = vdwg.mxu0
    %v114 = vmax.f32 %v112, 0.0
    %v115 = vld [vmem:[#allocation6] sm:$0xff]
    %v116 = vld [vmem:[#allocation6 + $0x8] sm:$0xff]
    %v117 = vld [vmem:[#allocation6 + $0x10] sm:$0xff]
    %v118 = vld [vmem:[#allocation6 + $0x18] sm:$0xff]
    %v119 = vld [vmem:[#allocation6 + $0x20] sm:$0xff]
    %v120 = vld [vmem:[#allocation6 + $0x28] sm:$0xff]
    %v121 = vld [vmem:[#allocation6 + $0x30] sm:$0xff]
    %v122 = vld [vmem:[#allocation6 + $0x38] sm:$0xff]
    %v123 = vld [vmem:[#allocation6 + $0x40] sm:$0xff]
    %v124 = vld [vmem:[#allocation6 + $0x48] sm:$0xff]
    %v125 = vld [vmem:[#allocation6 + $0x50] sm:$0xff]
    %v126 = vld [vmem:[#allocation6 + $0x58] sm:$0xff]
    %v127 = vld [vmem:[#allocation6 + $0x60] sm:$0xff]
    %v128 = vld [vmem:[#allocation6 + $0x68] sm:$0xff]
    %v129 = vld [vmem:[#allocation6 + $0x70] sm:$0xff]
    %v130 = vld [vmem:[#allocation6 + $0x78] sm:$0xff]
    %131 = vmatpush.msra.mxu0 %v130
    %132 = vmatpush.msra.mxu0 %v129
    %133 = vmatpush.msra.mxu0 %v128
    %134 = vmatpush.msra.mxu0 %v127
    %135 = vmatpush.msra.mxu0 %v126
    %136 = vmatpush.msra.mxu0 %v125
    %137 = vmatpush.msra.mxu0 %v124
    %138 = vmatpush.msra.mxu0 %v123
    %139 = vmatpush.msra.mxu0 %v122
    %140 = vmatpush.msra.mxu0 %v121
    %141 = vmatpush.msra.mxu0 %v120
    %142 = vmatpush.msra.mxu0 %v119
    %143 = vmatpush.msra.mxu0 %v118
    %144 = vmatpush.msra.mxu0 %v117
    %145 = vmatpush.msra.mxu0 %v116
    %146 = vmatpush.msra.mxu0 %v115
    %147 = vmatmul.f32.gmra.mxu0 %v114
    %v148 = vpop.f32.mrf.mxu0
    %v149 = vadd.f32 0.0, %v148
    %150 = vdwg.mxu0
    %v151 = vmax.f32 %v149, 0.0
    %v152 = vld [vmem:[#allocation7] sm:$0xff]
    %v153 = vld [vmem:[#allocation7 + $0x8] sm:$0xff]
    %v154 = vld [vmem:[#allocation7 + $0x10] sm:$0xff]
    %v155 = vld [vmem:[#allocation7 + $0x18] sm:$0xff]
    %v156 = vld [vmem:[#allocation7 + $0x20] sm:$0xff]
    %v157 = vld [vmem:[#allocation7 + $0x28] sm:$0xff]
    %v158 = vld [vmem:[#allocation7 + $0x30] sm:$0xff]
    %v159 = vld [vmem:[#allocation7 + $0x38] sm:$0xff]
    %v160 = vld [vmem:[#allocation7 + $0x40] sm:$0xff]
    %v161 = vld [vmem:[#allocation7 + $0x48] sm:$0xff]
    %v162 = vld [vmem:[#allocation7 + $0x50] sm:$0xff]
    %v163 = vld [vmem:[#allocation7 + $0x58] sm:$0xff]
    %v164 = vld [vmem:[#allocation7 + $0x60] sm:$0xff]
    %v165 = vld [vmem:[#allocation7 + $0x68] sm:$0xff]
    %v166 = vld [vmem:[#allocation7 + $0x70] sm:$0xff]
    %v167 = vld [vmem:[#allocation7 + $0x78] sm:$0xff]
    %168 = vmatpush.msra.mxu0 %v167
    %169 = vmatpush.msra.mxu0 %v166
    %170 = vmatpush.msra.mxu0 %v165
    %171 = vmatpush.msra.mxu0 %v164
    %172 = vmatpush.msra.mxu0 %v163
    %173 = vmatpush.msra.mxu0 %v162
    %174 = vmatpush.msra.mxu0 %v161
    %175 = vmatpush.msra.mxu0 %v160
    %176 = vmatpush.msra.mxu0 %v159
    %177 = vmatpush.msra.mxu0 %v158
    %178 = vmatpush.msra.mxu0 %v157
    %179 = vmatpush.msra.mxu0 %v156
    %180 = vmatpush.msra.mxu0 %v155
    %181 = vmatpush.msra.mxu0 %v154
    %182 = vmatpush.msra.mxu0 %v153
    %183 = vmatpush.msra.mxu0 %v152
    %184 = vmatmul.f32.gmra.mxu0 %v151
    %v185 = vpop.f32.mrf.mxu0
    %v186 = vadd.f32 0.0, %v185
    %187 = vdwg.mxu0
    %v188 = vxor.u32 %v186, 2147483648
    %v189 = vmul.f32 %v188, 1.442695
    %v190 = vpow.pop %v189
    %v191 = vadd.f32 %v190, 1.0
    %v192 = vrcp.pop %v191
    %v193 = vmul.f32 %v191, %v192
    %v194 = vsub.f32 1.0, %v193
    %v195 = vmul.f32 %v192, %v194
    %v196 = vadd.f32 %v192, %v195
    %vm197 = vweird.f32 %v191
    %vm198 = vweird.f32 %v192
    %vm199 = vmor %vm197, %vm198
    %v200 = vsel %vm199, %v192, %v196
    %v201 = vand.u32 2147483647, %v191
    %vm202 = vcmp.eq.f32.partialorder %v201, 8.507059e+37
    %v203 = vand.u32 %v191, 2147483648
    %v204 = vor.u32 1.1754944e-38, %v203
    %v205 = vsel %vm202, %v204, %v200
    %v206 = vmul.f32 1.0, %v205
    %v207 = vlaneseq
    %v208 = vand.u32 %v207, 127
    %vm209 = vcmp.eq.s32.totalorder %v208, 4
    %v210 = vsel %vm209, 1.0, 0.0
    %v211 = vsub.f32 %v206, %v186
    %v212 = vmul.f32 %v210, %v211
    %v213 = vadd.f32 %v186, %v212
    %214 = vst [vmem:[%s5] sm:$0xff] %v213
    // Predicated region
    $region38: #{_forward.1} parent=1 // pred_check
      _
    $region39: #{_forward.1} parent=1 // pred_check_branch
      %216 = sbr.rel (0) target = $region41
    $region40: #{_forward.1} parent=1 // pred_region
      _
    $region41: #{_forward.1} parent=1 // pred_fallthru
      _
    // Predicated region
    $region42: #{_forward.1} parent=1 // pred_check
      _
    $region43: #{_forward.1} parent=1 // pred_check_branch
      %218 = sbr.rel (0) target = $region45
    $region44: #{_forward.1} parent=1 // pred_region
      _
    $region45: #{_forward.1} parent=1 // pred_fallthru
      _
    %219 = vsyncpa [#allocation3], 1
    %220 = vsyncpa [#allocation5], 1
    %221 = vsyncpa [#allocation8], 1

</llo_original>
